<compile_context>
chip_gen: v7x
topology: tpu7x:2x2x1
jax: 0.10.0
libtpu: 0.0.40
codegen_flags: <defaults>
</compile_context>

<pallas_src>
import functools
import math

import jax
import jax.numpy as jnp
from jax.experimental import pallas as pl
from jax.experimental.pallas import tpu as pltpu


def mlp_kernel(x_ref, w_ref, b_ref, o_ref):
    # x_ref: (tile_rows, fold*in_dim) bf16   -- `fold` batch rows packed per vreg row
    # w_ref: (fold*in_dim, fold*hidden) bf16 -- block_diag(W, ..., W)
    # b_ref: (1, fold*hidden) f32            -- bias tiled `fold` times
    # o_ref: (tile_rows, fold*hidden) f32    -- `fold` hidden vectors packed per row
    acc = jnp.dot(x_ref[...], w_ref[...], preferred_element_type=jnp.float32)
    o_ref[...] = jnp.maximum(acc + b_ref[...], 0.0).astype(o_ref.dtype)


def _round_up(x, m):
    return ((x + m - 1) // m) * m


def _min_fold(d):
    # Smallest f such that f * d is a multiple of 128 (lane width).
    return 128 // math.gcd(d, 128)


@functools.partial(jax.jit, static_argnames=("tile_b",))
def mlp_forward(user_id, item_id, params, *, tile_b=None):
    """NeuMF-MLP forward: embedding lookup (glue) + fused concat/linear/relu kernel."""
    user_table = params["user_emb"]
    item_table = params["item_emb"]
    w = params["w"]                                   # (in_dim, hidden) f32
    b = params["b"]                                   # (hidden,) f32
    in_dim, hidden = w.shape

    # ---- Embedding gather (like nn.Embedding) + concat, done once wrapper-side ----------
    # NOTE: jnp.take clamps out-of-range ids silently (PyTorch nn.Embedding raises).
    # TODO(synk): at very large batch, fuse the gather in-kernel (scalar-prefetched ids +
    # VMEM-resident 19 KiB tables); at these sizes the gathered bf16 array is ~noise.
    u_vec = jnp.take(user_table, user_id, axis=0)     # (B, UD)
    i_vec = jnp.take(item_table, item_id, axis=0)     # (B, ID)
    x = jnp.concatenate([u_vec, i_vec], axis=-1).astype(jnp.bfloat16)   # (B, in_dim)
    B = x.shape[0]

    # ---- Row-folding factor: make both K and the output width lane-dense (x128) ----------
    fa, fb = _min_fold(in_dim), _min_fold(hidden)
    fold = fa * fb // math.gcd(fa, fb)                # = 2 for in_dim = hidden = 64
    if fold > 16:
        fold = 1          # odd dims: fall back to the narrow layout (correct, not lane-dense)
    Kf, Hf = fold * in_dim, fold * hidden

    # ---- Tile / grid sizing ---------------------------------------------------------------
    row_align = fold * 16                             # bf16 sublane packing on folded rows
    if tile_b is None:
        b_rounded = _round_up(B, row_align)
        if b_rounded <= 2048:
            # Small batch: one grid step (single TensorCore on v5e/v6e; extra steps are
            # pure per-step overhead).  On v7x pass tile_b = B/4 explicitly to give each
            # TensorCore >=2 pipelined steps.
            tile_b = b_rounded
        else:
            # Large batch: big tiles amortize per-step overhead; multi-step grid keeps
            # both v7x TensorCores loaded and restores DMA/compute overlap.
            tile_b = 1024
    assert tile_b % row_align == 0, (
        f"tile_b must be a multiple of {row_align} (fold={fold} x 16 bf16 sublanes)")

    B_pad = _round_up(B, tile_b)
    if B_pad != B:
        # Padded rows compute relu(b) and are sliced off below.
        x = jnp.pad(x, ((0, B_pad - B), (0, 0)))

    # ---- Fold activations / build block-diagonal weight (no zero-padding of real outputs) -
    rows = B_pad // fold
    x_f = x.reshape(rows, Kf)                         # free: contiguous reinterpretation
    if fold > 1:
        w_f = jnp.kron(jnp.eye(fold, dtype=w.dtype), w).astype(jnp.bfloat16)   # (Kf, Hf)
        b_f = jnp.tile(b.astype(jnp.float32), fold).reshape(1, Hf)
    else:
        w_f = w.astype(jnp.bfloat16)
        b_f = b.astype(jnp.float32).reshape(1, hidden)

    tile_rows = tile_b // fold
    grid = (B_pad // tile_b,)

    cost = pl.CostEstimate(
        flops=2 * rows * Kf * Hf,
        transcendentals=0,
        bytes_accessed=rows * Kf * 2 + Kf * Hf * 2 + Hf * 4 + rows * Hf * 4,
    )

    out_f = pl.pallas_call(
        mlp_kernel,
        out_shape=jax.ShapeDtypeStruct((rows, Hf), jnp.float32),
        grid_spec=pltpu.PrefetchScalarGridSpec(
            num_scalar_prefetch=0,
            grid=grid,
            in_specs=[
                pl.BlockSpec((tile_rows, Kf), lambda i: (i, 0)),
                # Constant block index -> weight/bias stay resident in VMEM across steps.
                pl.BlockSpec((Kf, Hf), lambda i: (0, 0)),
                pl.BlockSpec((1, Hf), lambda i: (0, 0)),
            ],
            out_specs=pl.BlockSpec((tile_rows, Hf), lambda i: (i, 0)),
        ),
        compiler_params=pltpu.CompilerParams(
            dimension_semantics=("parallel",)),
        cost_estimate=cost,
    )(x_f, w_f, b_f)

    out = out_f.reshape(B_pad, hidden)                # free: contiguous reinterpretation
    if B_pad != B:
        out = out[:B]
    return out


def init_params(key, user_num, item_num, u_dim, i_dim, hidden=64):
    k1, k2, k3, k4 = jax.random.split(key, 4)
    in_dim = u_dim + i_dim
    bound = 1.0 / math.sqrt(in_dim)
    return {
        # nn.Embedding default init: N(0, 1)
        "user_emb": jax.random.normal(k1, (user_num, u_dim), jnp.float32),
        "item_emb": jax.random.normal(k2, (item_num, i_dim), jnp.float32),
        # nn.Linear default init: U(-1/sqrt(in), 1/sqrt(in)); stored as (in, out)
        "w": jax.random.uniform(k3, (in_dim, hidden), jnp.float32, -bound, bound),
        "b": jax.random.uniform(k4, (hidden,), jnp.float32, -bound, bound),
    }


if __name__ == "__main__":
    key = jax.random.PRNGKey(0)
    kp = jax.random.fold_in(key, 1)

    user_num, item_num = 50, 100
    u_dim, i_dim, hidden = 32, 32, 64
    params = init_params(kp, user_num, item_num, u_dim, i_dim, hidden)

    def reference(uid, iid):
        # Same concat -> linear -> relu with matched bf16 operands / f32 accumulation.
        u = jnp.take(params["user_emb"], uid, axis=0)
        i = jnp.take(params["item_emb"], iid, axis=0)
        xr = jnp.concatenate([u, i], -1).astype(jnp.bfloat16)
        return jnp.maximum(
            jnp.dot(xr, params["w"].astype(jnp.bfloat16),
                    preferred_element_type=jnp.float32) + params["b"], 0.0)

    ok = True
    for batch in (512, 200):          # 200 exercises the batch-padding / slice path
        ku, ki = jax.random.split(jax.random.fold_in(key, batch))
        user_id = jax.random.randint(ku, (batch,), 0, user_num, dtype=jnp.int32)
        item_id = jax.random.randint(ki, (batch,), 0, item_num, dtype=jnp.int32)

        out = jax.block_until_ready(mlp_forward(user_id, item_id, params))
        assert out.shape == (batch, hidden)
        assert out.dtype == jnp.float32
        ok &= bool(jnp.allclose(out, reference(user_id, item_id), atol=1e-4, rtol=1e-4))

    assert ok
    print("KERNEL_OK")
</pallas_src>

<mosaic_0001>
module attributes {stable_mosaic.version = 11 : i64} {
  func.func @mlp_kernel(%arg0: i32, %arg1: memref<256x128xbf16, #tpu.memory_space<vmem>>, %arg2: memref<128x128xbf16, #tpu.memory_space<vmem>>, %arg3: memref<1x128xf32, #tpu.memory_space<vmem>>, %arg4: memref<256x128xf32, #tpu.memory_space<vmem>>) attributes {dimension_semantics = [#tpu.dimension_semantics<parallel>], iteration_bounds = array<i64: 1>, scalar_prefetch = 0 : i64, scratch_operands = 0 : i64, tpu.core_type = #tpu.core_type<tc>, window_params = [{transform_indices = @transform_0, window_bounds = array<i64: 256, 128>}, {pipeline_mode = #tpu.pipeline_mode<synchronous>, transform_indices = @transform_1, window_bounds = array<i64: 128, 128>}, {pipeline_mode = #tpu.pipeline_mode<synchronous>, transform_indices = @transform_2, window_bounds = array<i64: 1, 128>}, {transform_indices = @transform_3, window_bounds = array<i64: 256, 128>}]} {
    %c0 = arith.constant 0 : index
    %c0_0 = arith.constant 0 : index
    %0 = vector.load %arg1[%c0, %c0_0] : memref<256x128xbf16, #tpu.memory_space<vmem>>, vector<256x128xbf16>
    %c0_1 = arith.constant 0 : index
    %c0_2 = arith.constant 0 : index
    %1 = vector.load %arg2[%c0_1, %c0_2] : memref<128x128xbf16, #tpu.memory_space<vmem>>, vector<128x128xbf16>
    %cst = arith.constant dense<0.000000e+00> : vector<256x128xf32>
    %2 = tpu.matmul %0, %1, %cst {dimension_numbers = #tpu.dot_dimension_numbers<[1], [0], [0], [1], [0, 0, 1, 1], [], []>} : vector<256x128xbf16>, vector<128x128xbf16>, vector<256x128xf32> -> vector<256x128xf32>
    %c0_3 = arith.constant 0 : index
    %c0_4 = arith.constant 0 : index
    %3 = vector.load %arg3[%c0_3, %c0_4] : memref<1x128xf32, #tpu.memory_space<vmem>>, vector<1x128xf32>
    %4 = vector.broadcast %3 : vector<1x128xf32> to vector<256x128xf32>
    %5 = arith.addf %2, %4 : vector<256x128xf32>
    %cst_5 = arith.constant 0.000000e+00 : f32
    %6 = vector.broadcast %cst_5 : f32 to vector<256x128xf32>
    %7 = arith.maximumf %5, %6 : vector<256x128xf32>
    %c0_6 = arith.constant 0 : index
    %c0_7 = arith.constant 0 : index
    %8 = vector.load %arg4[%c0_6, %c0_7] : memref<256x128xf32, #tpu.memory_space<vmem>>, vector<256x128xf32>
    tpu.vector_store %arg4[%c0_6, %c0_7], %7 {strides = array<i32>} : memref<256x128xf32, #tpu.memory_space<vmem>>, vector<256x128xf32>,
    return
  }
  func.func @transform_0(%arg0: i32) -> (i32, i32) {
    %c0_i32 = arith.constant 0 : i32
    %c0_i32_0 = arith.constant 0 : i32
    return %arg0, %c0_i32 : i32, i32
  }
  func.func @transform_1(%arg0: i32) -> (i32, i32) {
    %c0_i32 = arith.constant 0 : i32
    %c0_i32_0 = arith.constant 0 : i32
    %c0_i32_1 = arith.constant 0 : i32
    return %c0_i32, %c0_i32_0 : i32, i32
  }
  func.func @transform_2(%arg0: i32) -> (i32, i32) {
    %c0_i32 = arith.constant 0 : i32
    %c0_i32_0 = arith.constant 0 : i32
    %c0_i32_1 = arith.constant 0 : i32
    return %c0_i32, %c0_i32_0 : i32, i32
  }
  func.func @transform_3(%arg0: i32) -> (i32, i32) {
    %c0_i32 = arith.constant 0 : i32
    %c0_i32_0 = arith.constant 0 : i32
    return %arg0, %c0_i32 : i32, i32
  }
}

</mosaic_0001>

<llo_original>
// kernel: tile.8
$region0: #{tile.8}
  #allocation0 [shape = 's32[1]{0}', space=sflag, size = 0x4, scoped, tag = 'scoped memory for tile.8']
  %s0 = inlined_call_operand.vmem [shape: f32[64], index: 0, kind: input, shape index: {}]
  %s1 = inlined_call_operand.vmem [shape: f32[2,64], index: 1, kind: output, shape index: {}]
  // Predicated region
  $region2: #{tile.8} parent=0 // pred_check
    _
  $region3: #{tile.8} parent=0 // pred_check_branch
    %3 = sbr.rel (0) target = $region5
  $region4: #{tile.8} parent=0 // pred_region
    _
  $region5: #{tile.8} parent=0 // pred_fallthru
    _
  %v4 = vld [vmem:[%s0] ss:$0 sm:$0xff]
  %5 = vst [vmem:[%s1] sm:$0x3] %v4

// kernel: tile.9
$region0: #{tile.9}
  %s0 = inlined_call_operand.vmem [shape: f32[2,64], index: 0, kind: input, shape index: {}]
  %s1 = inlined_call_operand.vmem [shape: f32[1,128], index: 1, kind: output, shape index: {}]
  $region1: #{tile.9} parent=0
    #allocation0 [shape = 'u8[4096]{0}', space=vmem, size = 0x1000, scoped, tag = 'scoped mem for output reshape']
    #allocation1 [shape = 'u8[4096]{0}', space=vmem, size = 0x1000, scoped, tag = 'scoped mem for input reshape']
    %s3 = sshllo.u32 0, 2
    %v4 = vld [vmem:[%s0] sm:%s3]
    %5 = vst [vmem:[#allocation1] sm:%s3] %v4
    %v6 = vld [vmem:[#allocation1] sm:$0x1]
    %vm7 = vcmask 523264
    %8 = vst.msk [vmem:[#allocation0] sm:$0x1] %vm7, %v6
    %s9 = scalar_lea.vmem [#allocation1], 1
    %v10 = vld [vmem:[%s9] sm:$0x1]
    %11 = vrot.lane.b32.xlu0 %v10, 64
    %v12 = vpop.permute.xlu0 %11
    %vm13 = vcmask 1048064
    %14 = vst.msk [vmem:[#allocation0] sm:$0x1] %vm13, %v12
    %s16 = sshllo.u32 0, 1
    %v18 = vld [vmem:[#allocation0] sm:%s16]
    %s19 = sshllo.u32 0, 1
    %20 = vst [vmem:[%s1] sm:%s19] %v18

// kernel: mlp_forward.1
$region0: #{mlp_forward.1}
  #allocation0 [shape = 'u32[]', space=smem, size = 0x4, offset = 0x4, fixed_abs, tag = 'smem constant byte address 0x4 - core index']
  #allocation1 [shape = 'u32[144,128]{1,0:T(1,128)}', space=vmem, size = 0x12000, scoped, tag = 'internal scratch']
  %s0 = inlined_call_operand.vmem [shape: bf16[256,128], index: 0, kind: input, shape index: {}]
  %s1 = inlined_call_operand.vmem [shape: bf16[128,128], index: 1, kind: input, shape index: {}]
  %s2 = inlined_call_operand.vmem [shape: f32[1,128], index: 2, kind: input, shape index: {}]
  %s3 = inlined_call_operand.vmem [shape: f32[256,128], index: 3, kind: output, shape index: {}]
  %s4 = sld [smem:[#allocation0]]
  $region22: #{mlp_forward.1} parent=0
    _
  %s6 = ssub.s32 1, %s4
  %s7 = scalar_select 0, %s6, %s4
  // Predicated region
  $region2: #{mlp_forward.1} parent=0 // pred_check
    _
  $region3: #{mlp_forward.1} parent=0 // pred_check_branch
    %9 = sbr.rel (0) target = $region5
  $region4: #{mlp_forward.1} parent=0 // pred_region
    _
  $region5: #{mlp_forward.1} parent=0 // pred_fallthru
    _
  // Predicated region
  $region6: #{mlp_forward.1} parent=0 // pred_check
    _
  $region7: #{mlp_forward.1} parent=0 // pred_check_branch
    %11 = sbr.rel (0) target = $region9
  $region8: #{mlp_forward.1} parent=0 // pred_region
    _
  $region9: #{mlp_forward.1} parent=0 // pred_fallthru
    _
  // Predicated region
  $region10: #{mlp_forward.1} parent=0 // pred_check
    _
  $region11: #{mlp_forward.1} parent=0 // pred_check_branch
    %13 = sbr.rel (0) target = $region13
  $region12: #{mlp_forward.1} parent=0 // pred_region
    _
  $region13: #{mlp_forward.1} parent=0 // pred_fallthru
    _
  %v15 = vld [vmem:[%s0] sm:$0xf]
  %v16 = vld [vmem:[%s0 + $0x4] sm:$0xf]
  %v17 = vld [vmem:[%s0 + $0x8] sm:$0xf]
  %v18 = vld [vmem:[%s0 + $0xc] sm:$0xf]
  %v19 = vld [vmem:[%s0 + $0x10] sm:$0xf]
  %v20 = vld [vmem:[%s0 + $0x14] sm:$0xf]
  %v21 = vld [vmem:[%s0 + $0x18] sm:$0xf]
  %v22 = vld [vmem:[%s0 + $0x1c] sm:$0xf]
  %v23 = vld [vmem:[%s0 + $0x20] sm:$0xf]
  %v24 = vld [vmem:[%s0 + $0x24] sm:$0xf]
  %v25 = vld [vmem:[%s0 + $0x28] sm:$0xf]
  %v26 = vld [vmem:[%s0 + $0x2c] sm:$0xf]
  %v27 = vld [vmem:[%s0 + $0x30] sm:$0xf]
  %v28 = vld [vmem:[%s0 + $0x34] sm:$0xf]
  %v29 = vld [vmem:[%s0 + $0x38] sm:$0xf]
  %v30 = vld [vmem:[%s0 + $0x3c] sm:$0xf]
  %v31 = vld [vmem:[%s0 + $0x40] sm:$0xf]
  %v32 = vld [vmem:[%s0 + $0x44] sm:$0xf]
  %v33 = vld [vmem:[%s0 + $0x48] sm:$0xf]
  %v34 = vld [vmem:[%s0 + $0x4c] sm:$0xf]
  %v35 = vld [vmem:[%s0 + $0x50] sm:$0xf]
  %v36 = vld [vmem:[%s0 + $0x54] sm:$0xf]
  %v37 = vld [vmem:[%s0 + $0x58] sm:$0xf]
  %v38 = vld [vmem:[%s0 + $0x5c] sm:$0xf]
  %v39 = vld [vmem:[%s0 + $0x60] sm:$0xf]
  %v40 = vld [vmem:[%s0 + $0x64] sm:$0xf]
  %v41 = vld [vmem:[%s0 + $0x68] sm:$0xf]
  %v42 = vld [vmem:[%s0 + $0x6c] sm:$0xf]
  %v43 = vld [vmem:[%s0 + $0x70] sm:$0xf]
  %v44 = vld [vmem:[%s0 + $0x74] sm:$0xf]
  %v45 = vld [vmem:[%s0 + $0x78] sm:$0xf]
  %v46 = vld [vmem:[%s0 + $0x7c] sm:$0xf]
  %v47 = vld [vmem:[%s1] sm:$0xf]
  %v48 = vld [vmem:[%s1 + $0x4] sm:$0xf]
  %v49 = vld [vmem:[%s1 + $0x8] sm:$0xf]
  %v50 = vld [vmem:[%s1 + $0xc] sm:$0xf]
  %v51 = vld [vmem:[%s1 + $0x10] sm:$0xf]
  %v52 = vld [vmem:[%s1 + $0x14] sm:$0xf]
  %v53 = vld [vmem:[%s1 + $0x18] sm:$0xf]
  %v54 = vld [vmem:[%s1 + $0x1c] sm:$0xf]
  %v55 = vld [vmem:[%s1 + $0x20] sm:$0xf]
  %v56 = vld [vmem:[%s1 + $0x24] sm:$0xf]
  %v57 = vld [vmem:[%s1 + $0x28] sm:$0xf]
  %v58 = vld [vmem:[%s1 + $0x2c] sm:$0xf]
  %v59 = vld [vmem:[%s1 + $0x30] sm:$0xf]
  %v60 = vld [vmem:[%s1 + $0x34] sm:$0xf]
  %v61 = vld [vmem:[%s1 + $0x38] sm:$0xf]
  %v62 = vld [vmem:[%s1 + $0x3c] sm:$0xf]
  %v63 = vld [vmem:[%s2] sm:$0x1]
  %v65 = vlaneseq
  %v66 = vshrl.u32 %v65, 7
  %v67 = vsub.s32 0, %v66
  %v68 = vrot.slane %v63, %v67
  %v102 = vunpack.c.l.b16 %v15
  %v103 = vunpack.c.l.b16 %v16
  %v104 = vunpack.c.l.b16 %v17
  %v105 = vunpack.c.l.b16 %v18
  %v106 = vunpack.c.l.b16 %v19
  %v107 = vunpack.c.l.b16 %v20
  %v108 = vunpack.c.l.b16 %v21
  %v109 = vunpack.c.l.b16 %v22
  %v110 = vunpack.c.l.b16 %v23
  %v111 = vunpack.c.l.b16 %v24
  %v112 = vunpack.c.l.b16 %v25
  %v113 = vunpack.c.l.b16 %v26
  %v114 = vunpack.c.l.b16 %v27
  %v115 = vunpack.c.l.b16 %v28
  %v116 = vunpack.c.l.b16 %v29
  %v117 = vunpack.c.l.b16 %v30
  %v118 = vunpack.c.l.b16 %v31
  %v119 = vunpack.c.l.b16 %v32
  %v120 = vunpack.c.l.b16 %v33
  %v121 = vunpack.c.l.b16 %v34
  %v122 = vunpack.c.l.b16 %v35
  %v123 = vunpack.c.l.b16 %v36
  %v124 = vunpack.c.l.b16 %v37
  %v125 = vunpack.c.l.b16 %v38
  %v126 = vunpack.c.l.b16 %v39
  %v127 = vunpack.c.l.b16 %v40
  %v128 = vunpack.c.l.b16 %v41
  %v129 = vunpack.c.l.b16 %v42
  %v130 = vunpack.c.l.b16 %v43
  %v131 = vunpack.c.l.b16 %v44
  %v132 = vunpack.c.l.b16 %v45
  %v133 = vunpack.c.l.b16 %v46
  %v134 = vpack.c.b16 %v103, %v102
  %v135 = vpack.c.b16 %v105, %v104
  %v136 = vpack.c.b16 %v107, %v106
  %v137 = vpack.c.b16 %v109, %v108
  %v138 = vpack.c.b16 %v111, %v110
  %v139 = vpack.c.b16 %v113, %v112
  %v140 = vpack.c.b16 %v115, %v114
  %v141 = vpack.c.b16 %v117, %v116
  %v142 = vpack.c.b16 %v119, %v118
  %v143 = vpack.c.b16 %v121, %v120
  %v144 = vpack.c.b16 %v123, %v122
  %v145 = vpack.c.b16 %v125, %v124
  %v146 = vpack.c.b16 %v127, %v126
  %v147 = vpack.c.b16 %v129, %v128
  %v148 = vpack.c.b16 %v131, %v130
  %v149 = vpack.c.b16 %v133, %v132
  %v182 = vunpack.c.l.b16 %v47
  %v183 = vunpack.c.l.b16 %v48
  %v184 = vunpack.c.l.b16 %v49
  %v185 = vunpack.c.l.b16 %v50
  %v186 = vunpack.c.l.b16 %v51
  %v187 = vunpack.c.l.b16 %v52
  %v188 = vunpack.c.l.b16 %v53
  %v189 = vunpack.c.l.b16 %v54
  %v190 = vunpack.c.l.b16 %v55
  %v191 = vunpack.c.l.b16 %v56
  %v192 = vunpack.c.l.b16 %v57
  %v193 = vunpack.c.l.b16 %v58
  %v194 = vunpack.c.l.b16 %v59
  %v195 = vunpack.c.l.b16 %v60
  %v196 = vunpack.c.l.b16 %v61
  %v197 = vunpack.c.l.b16 %v62
  %v198 = vpack.c.b16 %v183, %v182
  %v199 = vpack.c.b16 %v185, %v184
  %v200 = vpack.c.b16 %v187, %v186
  %v201 = vpack.c.b16 %v189, %v188
  %v202 = vpack.c.b16 %v191, %v190
  %v203 = vpack.c.b16 %v193, %v192
  %v204 = vpack.c.b16 %v195, %v194
  %v205 = vpack.c.b16 %v197, %v196
  %214 = vmatprep.subr.bf16.mxu0 0
  %215 = vmatpush1.bf16.msra.mxu0 %v198
  %216 = vmatprep.subr.bf16.mxu0 0
  %217 = vmatpush1.bf16.msra.mxu0 %v199
  %218 = vmatprep.subr.bf16.mxu0 0
  %219 = vmatpush1.bf16.msra.mxu0 %v200
  %220 = vmatprep.subr.bf16.mxu0 0
  %221 = vmatpush1.bf16.msra.mxu0 %v201
  %222 = vmatprep.subr.bf16.mxu0 0
  %223 = vmatpush1.bf16.msra.mxu0 %v202
  %224 = vmatprep.subr.bf16.mxu0 0
  %225 = vmatpush1.bf16.msra.mxu0 %v203
  %226 = vmatprep.subr.bf16.mxu0 0
  %227 = vmatpush1.bf16.msra.mxu0 %v204
  %228 = vmatprep.subr.bf16.mxu0 0
  %229 = vmatpush1.bf16.msra.mxu0 %v205
  %230 = vmatprep.subr.bf16.mxu0 0
  %231 = vmatpush1.bf16.msra.mxu0 0
  %232 = vmatprep.subr.bf16.mxu0 0
  %233 = vmatpush1.bf16.msra.mxu0 0
  %234 = vmatprep.subr.bf16.mxu0 0
  %235 = vmatpush1.bf16.msra.mxu0 0
  %236 = vmatprep.subr.bf16.mxu0 0
  %237 = vmatpush1.bf16.msra.mxu0 0
  %238 = vmatprep.subr.bf16.mxu0 0
  %239 = vmatpush1.bf16.msra.mxu0 0
  %240 = vmatprep.subr.bf16.mxu0 0
  %241 = vmatpush1.bf16.msra.mxu0 0
  %242 = vmatprep.subr.bf16.mxu0 0
  %243 = vmatpush1.bf16.msra.mxu0 0
  %244 = vmatprep.subr.bf16.mxu0 0
  %245 = vmatpush1.bf16.msra.mxu0 0
  %246 = vmatprep.mubr.bf16.mxu0 0
  %247 = vmatmul.mubr.bf16.gmra.mrb[0].mxu0 %v134
  %v248 = vpop.f32.mrb[0].mxu0
  %v249 = vadd.f32 %v68, %v248
  %v250 = vpop.f32.mrb[0].mxu0
  %v251 = vpop.f32.mrb[0].mxu0
  %v252 = vadd.f32 %v68, %v251
  %v253 = vpop.f32.mrb[0].mxu0
  %254 = vmatprep.mubr.bf16.mxu0 0
  %255 = vmatmul.mubr.bf16.gmra.mrb[0].mxu0 %v135
  %v256 = vpop.f32.mrb[0].mxu0
  %v257 = vadd.f32 %v68, %v256
  %v258 = vpop.f32.mrb[0].mxu0
  %v259 = vpop.f32.mrb[0].mxu0
  %v260 = vadd.f32 %v68, %v259
  %v261 = vpop.f32.mrb[0].mxu0
  %262 = vmatprep.mubr.bf16.mxu0 0
  %263 = vmatmul.mubr.bf16.gmra.mrb[0].mxu0 %v136
  %v264 = vpop.f32.mrb[0].mxu0
  %v265 = vadd.f32 %v68, %v264
  %v266 = vpop.f32.mrb[0].mxu0
  %v267 = vpop.f32.mrb[0].mxu0
  %v268 = vadd.f32 %v68, %v267
  %v269 = vpop.f32.mrb[0].mxu0
  %270 = vmatprep.mubr.bf16.mxu0 0
  %271 = vmatmul.mubr.bf16.gmra.mrb[0].mxu0 %v137
  %v272 = vpop.f32.mrb[0].mxu0
  %v273 = vadd.f32 %v68, %v272
  %v274 = vpop.f32.mrb[0].mxu0
  %v275 = vpop.f32.mrb[0].mxu0
  %v276 = vadd.f32 %v68, %v275
  %v277 = vpop.f32.mrb[0].mxu0
  %278 = vmatprep.mubr.bf16.mxu0 0
  %279 = vmatmul.mubr.bf16.gmra.mrb[0].mxu0 %v138
  %v280 = vpop.f32.mrb[0].mxu0
  %v281 = vadd.f32 %v68, %v280
  %v282 = vpop.f32.mrb[0].mxu0
  %v283 = vpop.f32.mrb[0].mxu0
  %v284 = vadd.f32 %v68, %v283
  %v285 = vpop.f32.mrb[0].mxu0
  %286 = vmatprep.mubr.bf16.mxu0 0
  %287 = vmatmul.mubr.bf16.gmra.mrb[0].mxu0 %v139
  %v288 = vpop.f32.mrb[0].mxu0
  %v289 = vadd.f32 %v68, %v288
  %v290 = vpop.f32.mrb[0].mxu0
  %v291 = vpop.f32.mrb[0].mxu0
  %v292 = vadd.f32 %v68, %v291
  %v293 = vpop.f32.mrb[0].mxu0
  %294 = vmatprep.mubr.bf16.mxu0 0
  %295 = vmatmul.mubr.bf16.gmra.mrb[0].mxu0 %v140
  %v296 = vpop.f32.mrb[0].mxu0
  %v297 = vadd.f32 %v68, %v296
  %v298 = vpop.f32.mrb[0].mxu0
  %v299 = vpop.f32.mrb[0].mxu0
  %v300 = vadd.f32 %v68, %v299
  %v301 = vpop.f32.mrb[0].mxu0
  %302 = vmatprep.mubr.bf16.mxu0 0
  %303 = vmatmul.mubr.bf16.gmra.mrb[0].mxu0 %v141
  %v304 = vpop.f32.mrb[0].mxu0
  %v305 = vadd.f32 %v68, %v304
  %v306 = vpop.f32.mrb[0].mxu0
  %v307 = vpop.f32.mrb[0].mxu0
  %v308 = vadd.f32 %v68, %v307
  %v309 = vpop.f32.mrb[0].mxu0
  %310 = vmatprep.mubr.bf16.mxu0 0
  %311 = vmatmul.mubr.bf16.gmra.mrb[0].mxu0 %v142
  %v312 = vpop.f32.mrb[0].mxu0
  %v313 = vadd.f32 %v68, %v312
  %v314 = vpop.f32.mrb[0].mxu0
  %v315 = vpop.f32.mrb[0].mxu0
  %v316 = vadd.f32 %v68, %v315
  %v317 = vpop.f32.mrb[0].mxu0
  %318 = vmatprep.mubr.bf16.mxu0 0
  %319 = vmatmul.mubr.bf16.gmra.mrb[0].mxu0 %v143
  %v320 = vpop.f32.mrb[0].mxu0
  %v321 = vadd.f32 %v68, %v320
  %v322 = vpop.f32.mrb[0].mxu0
  %v323 = vpop.f32.mrb[0].mxu0
  %v324 = vadd.f32 %v68, %v323
  %v325 = vpop.f32.mrb[0].mxu0
  %326 = vmatprep.mubr.bf16.mxu0 0
  %327 = vmatmul.mubr.bf16.gmra.mrb[0].mxu0 %v144
  %v328 = vpop.f32.mrb[0].mxu0
  %v329 = vadd.f32 %v68, %v328
  %v330 = vpop.f32.mrb[0].mxu0
  %v331 = vpop.f32.mrb[0].mxu0
  %v332 = vadd.f32 %v68, %v331
  %v333 = vpop.f32.mrb[0].mxu0
  %334 = vmatprep.mubr.bf16.mxu0 0
  %335 = vmatmul.mubr.bf16.gmra.mrb[0].mxu0 %v145
  %v336 = vpop.f32.mrb[0].mxu0
  %v337 = vadd.f32 %v68, %v336
  %v338 = vpop.f32.mrb[0].mxu0
  %v339 = vpop.f32.mrb[0].mxu0
  %v340 = vadd.f32 %v68, %v339
  %v341 = vpop.f32.mrb[0].mxu0
  %342 = vmatprep.mubr.bf16.mxu0 0
  %343 = vmatmul.mubr.bf16.gmra.mrb[0].mxu0 %v146
  %v344 = vpop.f32.mrb[0].mxu0
  %v345 = vadd.f32 %v68, %v344
  %v346 = vpop.f32.mrb[0].mxu0
  %v347 = vpop.f32.mrb[0].mxu0
  %v348 = vadd.f32 %v68, %v347
  %v349 = vpop.f32.mrb[0].mxu0
  %350 = vmatprep.mubr.bf16.mxu0 0
  %351 = vmatmul.mubr.bf16.gmra.mrb[0].mxu0 %v147
  %v352 = vpop.f32.mrb[0].mxu0
  %v353 = vadd.f32 %v68, %v352
  %v354 = vpop.f32.mrb[0].mxu0
  %v355 = vpop.f32.mrb[0].mxu0
  %v356 = vadd.f32 %v68, %v355
  %v357 = vpop.f32.mrb[0].mxu0
  %358 = vmatprep.mubr.bf16.mxu0 0
  %359 = vmatmul.mubr.bf16.gmra.mrb[0].mxu0 %v148
  %v360 = vpop.f32.mrb[0].mxu0
  %v361 = vadd.f32 %v68, %v360
  %v362 = vpop.f32.mrb[0].mxu0
  %v363 = vpop.f32.mrb[0].mxu0
  %v364 = vadd.f32 %v68, %v363
  %v365 = vpop.f32.mrb[0].mxu0
  %366 = vmatprep.mubr.bf16.mxu0 0
  %367 = vmatmul.mubr.bf16.gmra.mrb[0].mxu0 %v149
  %v368 = vpop.f32.mrb[0].mxu0
  %v369 = vadd.f32 %v68, %v368
  %v370 = vpop.f32.mrb[0].mxu0
  %v371 = vpop.f32.mrb[0].mxu0
  %v372 = vadd.f32 %v68, %v371
  %v373 = vpop.f32.mrb[0].mxu0
  %374 = vdwg.mxu0
  %v375 = vmax.f32 %v249, 0.0
  %v376 = vmax.f32 %v252, 0.0
  %v377 = vmax.f32 %v257, 0.0
  %v378 = vmax.f32 %v260, 0.0
  %v379 = vmax.f32 %v265, 0.0
  %v380 = vmax.f32 %v268, 0.0
  %v381 = vmax.f32 %v273, 0.0
  %v382 = vmax.f32 %v276, 0.0
  %v383 = vmax.f32 %v281, 0.0
  %v384 = vmax.f32 %v284, 0.0
  %v385 = vmax.f32 %v289, 0.0
  %v386 = vmax.f32 %v292, 0.0
  %v387 = vmax.f32 %v297, 0.0
  %v388 = vmax.f32 %v300, 0.0
  %v389 = vmax.f32 %v305, 0.0
  %v390 = vmax.f32 %v308, 0.0
  %v391 = vmax.f32 %v313, 0.0
  %v392 = vmax.f32 %v316, 0.0
  %v393 = vmax.f32 %v321, 0.0
  %v394 = vmax.f32 %v324, 0.0
  %v395 = vmax.f32 %v329, 0.0
  %v396 = vmax.f32 %v332, 0.0
  %v397 = vmax.f32 %v337, 0.0
  %v398 = vmax.f32 %v340, 0.0
  %v399 = vmax.f32 %v345, 0.0
  %v400 = vmax.f32 %v348, 0.0
  %v401 = vmax.f32 %v353, 0.0
  %v402 = vmax.f32 %v356, 0.0
  %v403 = vmax.f32 %v361, 0.0
  %v404 = vmax.f32 %v364, 0.0
  %v405 = vmax.f32 %v369, 0.0
  %v406 = vmax.f32 %v372, 0.0
  %407 = vst [vmem:[%s3] sm:$0xff] %v375
  %408 = vst [vmem:[%s3 + $0x8] sm:$0xff] %v376
  %409 = vst [vmem:[%s3 + $0x10] sm:$0xff] %v377
  %410 = vst [vmem:[%s3 + $0x18] sm:$0xff] %v378
  %411 = vst [vmem:[%s3 + $0x20] sm:$0xff] %v379
  %412 = vst [vmem:[%s3 + $0x28] sm:$0xff] %v380
  %413 = vst [vmem:[%s3 + $0x30] sm:$0xff] %v381
  %414 = vst [vmem:[%s3 + $0x38] sm:$0xff] %v382
  %415 = vst [vmem:[%s3 + $0x40] sm:$0xff] %v383
  %416 = vst [vmem:[%s3 + $0x48] sm:$0xff] %v384
  %417 = vst [vmem:[%s3 + $0x50] sm:$0xff] %v385
  %418 = vst [vmem:[%s3 + $0x58] sm:$0xff] %v386
  %419 = vst [vmem:[%s3 + $0x60] sm:$0xff] %v387
  %420 = vst [vmem:[%s3 + $0x68] sm:$0xff] %v388
  %421 = vst [vmem:[%s3 + $0x70] sm:$0xff] %v389
  %422 = vst [vmem:[%s3 + $0x78] sm:$0xff] %v390
  %423 = vst [vmem:[%s3 + $0x80] sm:$0xff] %v391
  %424 = vst [vmem:[%s3 + $0x88] sm:$0xff] %v392
  %425 = vst [vmem:[%s3 + $0x90] sm:$0xff] %v393
  %426 = vst [vmem:[%s3 + $0x98] sm:$0xff] %v394
  %427 = vst [vmem:[%s3 + $0xa0] sm:$0xff] %v395
  %428 = vst [vmem:[%s3 + $0xa8] sm:$0xff] %v396
  %429 = vst [vmem:[%s3 + $0xb0] sm:$0xff] %v397
  %430 = vst [vmem:[%s3 + $0xb8] sm:$0xff] %v398
  %431 = vst [vmem:[%s3 + $0xc0] sm:$0xff] %v399
  %432 = vst [vmem:[%s3 + $0xc8] sm:$0xff] %v400
  %433 = vst [vmem:[%s3 + $0xd0] sm:$0xff] %v401
  %434 = vst [vmem:[%s3 + $0xd8] sm:$0xff] %v402
  %435 = vst [vmem:[%s3 + $0xe0] sm:$0xff] %v403
  %436 = vst [vmem:[%s3 + $0xe8] sm:$0xff] %v404
  %437 = vst [vmem:[%s3 + $0xf0] sm:$0xff] %v405
  %438 = vst [vmem:[%s3 + $0xf8] sm:$0xff] %v406
  // Predicated region
  $region14: #{mlp_forward.1} parent=0 // pred_check
    _
  $region15: #{mlp_forward.1} parent=0 // pred_check_branch
    %440 = sbr.rel (0) target = $region17
  $region16: #{mlp_forward.1} parent=0 // pred_region
    _
  $region17: #{mlp_forward.1} parent=0 // pred_fallthru
    _
  // Predicated region
  $region18: #{mlp_forward.1} parent=0 // pred_check
    _
  $region19: #{mlp_forward.1} parent=0 // pred_check_branch
    %442 = sbr.rel (0) target = $region21
  $region20: #{mlp_forward.1} parent=0 // pred_region
    _
  $region21: #{mlp_forward.1} parent=0 // pred_fallthru
    _

</llo_original>
